<compile_context>
chip_gen: v5e
topology: v5e:2x2
jax: 0.10.0
libtpu: 0.0.40
codegen_flags: <defaults>
</compile_context>

<pallas_src>
import functools

import jax
import jax.numpy as jnp
from jax.experimental import pallas as pl
from jax.experimental.pallas import tpu as pltpu

LANES = 128
SUBLANES = 8


def _round_up(v, m):
    return ((v + m - 1) // m) * m


def _packed_sublanes(dtype):
    # Packed sublane tile: 8 rows for 32-bit, 16 for 16-bit, 32 for 8-bit dtypes.
    itemsize = jnp.dtype(dtype).itemsize
    return SUBLANES * max(1, 4 // itemsize)


def _sumsq_kernel(x_ref, y_ref, out_ref, *, tile_rows, total_rows,
                  blocks_per_core, n_valid_blocks, ragged, has_oob):
    """Accumulate (8, 128) partial sums of (x - y)^2 into this core's out slab."""
    c = pl.program_id(0)          # core-slab index ("parallel")
    i = pl.program_id(1)          # per-core block index ("arbitrary")
    g = c * blocks_per_core + i   # global block index (DMA index_map is clamped)
    last = n_valid_blocks - 1

    @pl.when(i == 0)
    def _():
        out_ref[...] = jnp.zeros_like(out_ref)

    def accum(masked):
        # TODO(synk): optional v7x/bf16 tweak — do the subtract in bf16 and cast
        # once if profiling ever shows the VALU slot binding for bf16 inputs.
        d = x_ref[...].astype(jnp.float32) - y_ref[...].astype(jnp.float32)
        sq = d * d
        if masked:
            # The final block may extend past the array; OOB rows hold unspecified
            # data (possibly NaN/Inf), masked *after* the square so it's discarded.
            row = jax.lax.broadcasted_iota(jnp.int32, (tile_rows, LANES), 0)
            sq = jnp.where(row + g * tile_rows < total_rows, sq, 0.0)
        # Fold (tile_rows, 128) -> (8, 128) with plain vreg adds (VPU only).
        out_ref[...] += sq.reshape(tile_rows // SUBLANES, SUBLANES, LANES).sum(axis=0)

    if not ragged and not has_oob:
        # Common aligned case: no branch, no mask on any step.
        accum(masked=False)
    elif not ragged:
        # Only the 2-core split over-covers by one block: skip it, never mask.
        @pl.when(g <= last)
        def _():
            accum(masked=False)
    else:
        @pl.when(g < last)
        def _():
            accum(masked=False)

        @pl.when(g == last)
        def _():
            accum(masked=True)
        # Blocks with g > last (at most one, from the 2-way split of an odd block
        # count) are skipped; their clamped DMA just re-reads a valid block.


def rmse_loss(x, y, *, tile_rows=8192):
    assert x.shape == y.shape, "RMSELoss expects x and y with identical shapes"
    n_elems = x.size

    # Keep the native dtype on the HBM->VMEM wire; cast to f32 inside the kernel.
    xf = x.reshape(-1)
    yf = y.reshape(-1)

    # Only pad the ragged tail up to a lane multiple (needed to form a (rows, 128)
    # slab at all). Common case n % 128 == 0: no pad, no extra HBM pass.
    rem = n_elems % LANES
    allow_fusion = None
    if rem:
        # allow_input_fusion lets XLA fuse this pad into the pallas_call operands
        # instead of materializing full padded copies in HBM.
        # TODO(synk): fully pad-free tail via 1-D element blocks or manual DMA.
        xf = jnp.pad(xf, (0, LANES - rem))
        yf = jnp.pad(yf, (0, LANES - rem))
        allow_fusion = [True, True]
    rows = xf.size // LANES
    x2d = xf.reshape(rows, LANES)
    y2d = yf.reshape(rows, LANES)

    # Clamp the tile for small inputs; round to the packed sublane tile of the
    # input dtypes (8 rows f32, 16 bf16, 32 int8/fp8).
    sub = max(_packed_sublanes(x.dtype), _packed_sublanes(y.dtype))
    t = min(tile_rows, _round_up(rows, sub))
    t = _round_up(t, sub)

    n_valid_blocks = pl.cdiv(rows, t)
    # Two output slabs so the "parallel" axis can shard across both TensorCores on
    # v7x; on 1-TC chips the extra axis runs sequentially at negligible cost.
    num_cores = 2 if n_valid_blocks >= 2 else 1
    blocks_per_core = pl.cdiv(n_valid_blocks, num_cores)
    has_oob = num_cores * blocks_per_core > n_valid_blocks
    ragged = (rows % t) != 0  # static Python bool

    kernel = functools.partial(
        _sumsq_kernel,
        tile_rows=t,
        total_rows=rows,
        blocks_per_core=blocks_per_core,
        n_valid_blocks=n_valid_blocks,
        ragged=ragged,
        has_oob=has_oob,
    )

    def in_index_map(c, i):
        # Clamp so the (at most one) over-covering block of the 2-way split never
        # issues an out-of-bounds DMA; its contribution is skipped in the body.
        g = c * blocks_per_core + i
        return (jnp.minimum(g, n_valid_blocks - 1), 0)

    bytes_per_elem = jnp.dtype(x.dtype).itemsize + jnp.dtype(y.dtype).itemsize
    partials = pl.pallas_call(
        kernel,
        out_shape=jax.ShapeDtypeStruct((num_cores, SUBLANES, LANES), jnp.float32),
        grid_spec=pltpu.PrefetchScalarGridSpec(
            num_scalar_prefetch=0,
            grid=(num_cores, blocks_per_core),
            in_specs=[
                pl.BlockSpec((t, LANES), in_index_map),
                pl.BlockSpec((t, LANES), in_index_map),
            ],
            out_specs=pl.BlockSpec((None, SUBLANES, LANES), lambda c, i: (c, 0, 0)),
        ),
        compiler_params=pltpu.CompilerParams(
            dimension_semantics=("parallel", "arbitrary"),
            # 16 MiB of double-buffered inputs at t=8192 plus elementwise temps:
            # clears v5e's 16 MiB scoped default, well under every gen's physical.
            vmem_limit_bytes=48 * 1024 * 1024,
            allow_input_fusion=allow_fusion,
        ),
        cost_estimate=pl.CostEstimate(
            flops=3 * n_elems,
            transcendentals=0,
            bytes_accessed=n_elems * bytes_per_elem,
        ),
    )(x2d, y2d)

    # Final tiny cross-lane reduce + mean + sqrt in plain JAX; n_elems is a Python
    # int, so no int32 overflow concerns for huge arrays.
    return jnp.sqrt(jnp.sum(partials) / n_elems)


if __name__ == "__main__":
    key = jax.random.PRNGKey(0)
    kx, ky = jax.random.split(key)
    # NCHW-shaped example inputs (only the element count matters semantically).
    x = jax.random.normal(kx, (2, 4, 16, 16), dtype=jnp.float32)
    y = jax.random.normal(ky, (2, 4, 16, 16), dtype=jnp.float32)

    loss = rmse_loss(x, y)
    jax.block_until_ready(loss)

    # Sanity check against pure-JAX reference.
    ref = jnp.sqrt(jnp.mean((x - y) ** 2))
    assert jnp.allclose(loss, ref, rtol=1e-5, atol=1e-6), (loss, ref)

    print("KERNEL_OK")
</pallas_src>

<mosaic_0001>
module attributes {stable_mosaic.version = 11 : i64} {
  func.func @_sumsq_kernel(%arg0: i32, %arg1: i32, %arg2: memref<16x128xf32, #tpu.memory_space<vmem>>, %arg3: memref<16x128xf32, #tpu.memory_space<vmem>>, %arg4: memref<1x8x128xf32, #tpu.memory_space<vmem>>) attributes {dimension_semantics = [#tpu.dimension_semantics<parallel>, #tpu.dimension_semantics<arbitrary>], iteration_bounds = array<i64: 1, 1>, scalar_prefetch = 0 : i64, scratch_operands = 0 : i64, tpu.core_type = #tpu.core_type<tc>, window_params = [{transform_indices = @transform_0, window_bounds = array<i64: 16, 128>}, {transform_indices = @transform_1, window_bounds = array<i64: 16, 128>}, {transform_indices = @transform_2, window_bounds = array<i64: 1, 8, 128>}]} {
    %c0_i32 = arith.constant 0 : i32
    %0 = arith.cmpi eq, %arg1, %c0_i32 : i32
    %1 = arith.extui %0 : i1 to i32
    %c0_i32_0 = arith.constant 0 : i32
    %2 = arith.cmpi ne, %1, %c0_i32_0 : i32
    scf.if %2 {
      %cst_10 = arith.constant 0.000000e+00 : f32
      %15 = vector.broadcast %cst_10 : f32 to vector<8x128xf32>
      %c0_11 = arith.constant 0 : index
      %c0_12 = arith.constant 0 : index
      %c0_13 = arith.constant 0 : index
      %16 = vector.load %arg4[%c0_11, %c0_12, %c0_13] : memref<1x8x128xf32, #tpu.memory_space<vmem>>, vector<1x8x128xf32>
      %17 = vector.shape_cast %16 : vector<1x8x128xf32> to vector<8x128xf32>
      %18 = vector.shape_cast %15 : vector<8x128xf32> to vector<1x8x128xf32>
      tpu.vector_store %arg4[%c0_11, %c0_12, %c0_13], %18 {strides = array<i32>} : memref<1x8x128xf32, #tpu.memory_space<vmem>>, vector<1x8x128xf32>,
    } else {
    }
    %c0 = arith.constant 0 : index
    %c0_1 = arith.constant 0 : index
    %3 = vector.load %arg2[%c0, %c0_1] : memref<16x128xf32, #tpu.memory_space<vmem>>, vector<16x128xf32>
    %c0_2 = arith.constant 0 : index
    %c0_3 = arith.constant 0 : index
    %4 = vector.load %arg3[%c0_2, %c0_3] : memref<16x128xf32, #tpu.memory_space<vmem>>, vector<16x128xf32>
    %5 = arith.subf %3, %4 : vector<16x128xf32>
    %6 = arith.mulf %5, %5 : vector<16x128xf32>
    %c0_4 = arith.constant 0 : index
    %c0_5 = arith.constant 0 : index
    %c0_6 = arith.constant 0 : index
    %7 = vector.load %arg4[%c0_4, %c0_5, %c0_6] : memref<1x8x128xf32, #tpu.memory_space<vmem>>, vector<1x8x128xf32>
    %8 = vector.shape_cast %7 : vector<1x8x128xf32> to vector<8x128xf32>
    %9 = vector.shape_cast %6 : vector<16x128xf32> to vector<2x8x128xf32>
    %cst = arith.constant dense<0.000000e+00> : vector<8x128xf32>
    %10 = vector.multi_reduction <add>, %9, %cst [0] : vector<2x8x128xf32> to vector<8x128xf32>
    %11 = arith.addf %8, %10 : vector<8x128xf32>
    %c0_7 = arith.constant 0 : index
    %c0_8 = arith.constant 0 : index
    %c0_9 = arith.constant 0 : index
    %12 = vector.load %arg4[%c0_7, %c0_8, %c0_9] : memref<1x8x128xf32, #tpu.memory_space<vmem>>, vector<1x8x128xf32>
    %13 = vector.shape_cast %12 : vector<1x8x128xf32> to vector<8x128xf32>
    %14 = vector.shape_cast %11 : vector<8x128xf32> to vector<1x8x128xf32>
    tpu.vector_store %arg4[%c0_7, %c0_8, %c0_9], %14 {strides = array<i32>} : memref<1x8x128xf32, #tpu.memory_space<vmem>>, vector<1x8x128xf32>,
    return
  }
  func.func @transform_0(%arg0: i32, %arg1: i32) -> (i32, i32) {
    %c1_i32 = arith.constant 1 : i32
    %0 = arith.muli %arg0, %c1_i32 : i32
    %1 = arith.addi %0, %arg1 : i32
    %c0_i32 = arith.constant 0 : i32
    %2 = arith.minsi %1, %c0_i32 : i32
    %c0_i32_0 = arith.constant 0 : i32
    %c0_i32_1 = arith.constant 0 : i32
    return %2, %c0_i32_0 : i32, i32
  }
  func.func @transform_1(%arg0: i32, %arg1: i32) -> (i32, i32) {
    %c1_i32 = arith.constant 1 : i32
    %0 = arith.muli %arg0, %c1_i32 : i32
    %1 = arith.addi %0, %arg1 : i32
    %c0_i32 = arith.constant 0 : i32
    %2 = arith.minsi %1, %c0_i32 : i32
    %c0_i32_0 = arith.constant 0 : i32
    %c0_i32_1 = arith.constant 0 : i32
    return %2, %c0_i32_0 : i32, i32
  }
  func.func @transform_2(%arg0: i32, %arg1: i32) -> (i32, i32, i32) {
    %c0_i32 = arith.constant 0 : i32
    %c0_i32_0 = arith.constant 0 : i32
    %c0_i32_1 = arith.constant 0 : i32
    return %arg0, %c0_i32, %c0_i32_0 : i32, i32, i32
  }
}

</mosaic_0001>

<llo_original>
// kernel: tpu_custom_call.1
$region0: #{tpu_custom_call.1}
  #allocation0 [shape = 'u32[]', space=smem, size = 0x4, offset = 0x4, fixed_abs, tag = 'smem constant byte address 0x4 - core index']
  #allocation1 [shape = 'u32[72,128]{1,0:T(1,128)}', space=vmem, size = 0x9000, scoped, tag = 'internal scratch']
  %s0 = inlined_call_operand.hbm [shape: f32[16,128], index: 0, kind: input, shape index: {}]
  %s1 = inlined_call_operand.hbm [shape: f32[16,128], index: 1, kind: input, shape index: {}]
  %s2 = inlined_call_operand.hbm [shape: f32[1,8,128], index: 2, kind: output, shape index: {}]
  %s3 = sld [smem:[#allocation0]]
  $region30: #{tpu_custom_call.1} parent=0
    _
  %s5 = ssub.s32 1, %s3
  %s6 = scalar_select 0, %s5, %s3
  $region1: #{tpu_custom_call.1} parent=0
    #allocation2 [shape = 'u8[8192]{0}', space=vmem, size = 0x2000, scoped, tag = 'input window, operand 0, single buffered']
    #allocation3 [shape = 's32[1]{0}', space=sflag, size = 0x4, scoped, tag = 'scoped memory for tpu_custom_call.1']
    #allocation4 [shape = 's32[1]{0}', space=sflag, size = 0x4, scoped, tag = 'scoped memory for tpu_custom_call.1']
    #allocation5 [shape = 'u8[8192]{0}', space=vmem, size = 0x2000, scoped, tag = 'input window, operand 1, single buffered']
    #allocation6 [shape = 's32[1]{0}', space=sflag, size = 0x4, scoped, tag = 'scoped memory for tpu_custom_call.1']
    #allocation7 [shape = 'u8[4096]{0}', space=vmem, size = 0x1000, scoped, tag = 'output window, operand 0, single buffered']
    %7 = vsyncpa [#allocation3], 0
    %8 = vsyncpa [#allocation6], 0
    %9 = vsyncpa [#allocation4], 0
    // Predicated region
    $region2: #{tpu_custom_call.1} parent=1 // pred_check
      _
    $region3: #{tpu_custom_call.1} parent=1 // pred_check_branch
      %11 = sbr.rel (0) target = $region5
    $region4: #{tpu_custom_call.1} parent=1 // pred_region
      %s12 = sadd.s32 0, 0
      %p13 = scmp.lt.s32.totalorder %s12, 0
      %s14 = scalar_select %p13, %s12, 0
      %s15 = smul.u32 2, %s14
      %17 = vsyncadd [#allocation3], 0
      %s18 = smul.addr %s15, 8
      %s19 = scalar_lea.hbm %s0, %s18
      %s20 = sshll.u32 %s19, 4
      %s21 = int_to_ptr.hbm [resolvable:$true] %s20
      %s22 = sshll.u32 [#allocation2], 4
      %s23 = int_to_ptr.vmem [resolvable:$true] %s22
      %28 = dma.hbm_to_vmem [thread:$0]  %s21, 256, %s23, [#allocation3], 128, 128, 8
    $region5: #{tpu_custom_call.1} parent=1 // pred_fallthru
      _
    // Predicated region
    $region6: #{tpu_custom_call.1} parent=1 // pred_check
      _
    $region7: #{tpu_custom_call.1} parent=1 // pred_check_branch
      %30 = sbr.rel (0) target = $region9
    $region8: #{tpu_custom_call.1} parent=1 // pred_region
      %s31 = sadd.s32 0, 0
      %p32 = scmp.lt.s32.totalorder %s31, 0
      %s33 = scalar_select %p32, %s31, 0
      %s34 = smul.u32 2, %s33
      %36 = vsyncadd [#allocation6], 0
      %s37 = smul.addr %s34, 8
      %s38 = scalar_lea.hbm %s1, %s37
      %s39 = sshll.u32 %s38, 4
      %s40 = int_to_ptr.hbm [resolvable:$true] %s39
      %s41 = sshll.u32 [#allocation5], 4
      %s42 = int_to_ptr.vmem [resolvable:$true] %s41
      %47 = dma.hbm_to_vmem [thread:$0]  %s40, 256, %s42, [#allocation6], 128, 128, 8
    $region9: #{tpu_custom_call.1} parent=1 // pred_fallthru
      _
    // Predicated region
    $region10: #{tpu_custom_call.1} parent=1 // pred_check
      _
    $region11: #{tpu_custom_call.1} parent=1 // pred_check_branch
      %49 = sbr.rel (0) target = $region13
    $region12: #{tpu_custom_call.1} parent=1 // pred_region
      %51 = dma.done [#allocation3], 256
    $region13: #{tpu_custom_call.1} parent=1 // pred_fallthru
      _
    // Predicated region
    $region14: #{tpu_custom_call.1} parent=1 // pred_check
      _
    $region15: #{tpu_custom_call.1} parent=1 // pred_check_branch
      %53 = sbr.rel (0) target = $region17
    $region16: #{tpu_custom_call.1} parent=1 // pred_region
      %55 = dma.done [#allocation6], 256
    $region17: #{tpu_custom_call.1} parent=1 // pred_fallthru
      _
    %s56 = sadd.s32 0, 0
    %p57 = scmp.lt.s32.totalorder %s56, 0
    %s58 = scalar_select %p57, %s56, 0
    %s59 = smul.u32 2, %s58
    %s60 = sadd.s32 0, 0
    %p61 = scmp.lt.s32.totalorder %s60, 0
    %s62 = scalar_select %p61, %s60, 0
    %s63 = smul.u32 2, %s62
    %p64 = scmp.eq.s32.totalorder 0, 0
    // Predicated region
    $region18: #{tpu_custom_call.1} parent=1 // pred_check
      %p65 = pneg %p64
    $region19: #{tpu_custom_call.1} parent=1 // pred_check_branch
      %67 = sbr.rel (%p65) target = $region21
    $region20: #{tpu_custom_call.1} parent=1 // pred_region
      %68 = vst [vmem:[#allocation7] sm:$0xff] 0.0
    $region21: #{tpu_custom_call.1} parent=1 // pred_fallthru
      _
    %v69 = vld [vmem:[#allocation2] sm:$0xff]
    %v70 = vld [vmem:[#allocation2 + $0x8] sm:$0xff]
    %v71 = vld [vmem:[#allocation5] sm:$0xff]
    %v72 = vld [vmem:[#allocation5 + $0x8] sm:$0xff]
    %v73 = vsub.f32 %v69, %v71
    %v74 = vsub.f32 %v70, %v72
    %v75 = vmul.f32 %v73, %v73
    %v76 = vmul.f32 %v74, %v74
    %v77 = vld [vmem:[#allocation7] sm:$0xff]
    %v78 = vadd.f32 %v75, %v76
    %v79 = vadd.f32 %v77, %v78
    %80 = vst [vmem:[#allocation7] sm:$0xff] %v79
    // Predicated region
    $region22: #{tpu_custom_call.1} parent=1 // pred_check
      _
    $region23: #{tpu_custom_call.1} parent=1 // pred_check_branch
      %82 = sbr.rel (0) target = $region25
    $region24: #{tpu_custom_call.1} parent=1 // pred_region
      %84 = vsyncadd [#allocation4], 0
      %s86 = sshll.u32 [#allocation7], 4
      %s87 = int_to_ptr.vmem [resolvable:$true] %s86
      %s88 = sshll.u32 %s2, 4
      %s89 = int_to_ptr.hbm [resolvable:$true] %s88
      %91 = dma.vmem_to_hbm [thread:$0]  %s87, 128, %s89, [#allocation4]
    $region25: #{tpu_custom_call.1} parent=1 // pred_fallthru
      _
    // Predicated region
    $region26: #{tpu_custom_call.1} parent=1 // pred_check
      _
    $region27: #{tpu_custom_call.1} parent=1 // pred_check_branch
      %93 = sbr.rel (0) target = $region29
    $region28: #{tpu_custom_call.1} parent=1 // pred_region
      %95 = dma.done [#allocation4], 128
    $region29: #{tpu_custom_call.1} parent=1 // pred_fallthru
      _
    %96 = vsyncpa [#allocation3], 1
    %97 = vsyncpa [#allocation6], 1
    %98 = vsyncpa [#allocation4], 1

</llo_original>
